<compile_context>
chip_gen: v7x
topology: tpu7x:2x2x1
jax: 0.10.0
libtpu: 0.0.40
codegen_flags: <defaults>
</compile_context>

<pallas_src>
import jax
import jax.numpy as jnp
from jax.experimental import pallas as pl
from jax.experimental.pallas import tpu as pltpu

SIGMA = 0.5      # CXLoss(sigma=0.5)
B_CONST = 1.0    # CXLoss(b=1.0)  (cancels in W / W_sum; folded away in-kernel)
EPS_REL = 1e-5
EPS_LOG = 1e-5


def _cx_kernel(mean_ref, t_ref, x_ref, out_ref, tn_ref, acc_ref):
    """One (batch b, q-block qi) step of the contextual-similarity map.

    mean_ref : (C, 1)       per-channel target mean (center_by_T)
    t_ref    : (1, C, P)    raw target features for batch b (all target patches)
    x_ref    : (1, C, Tq)   raw inference features, q-block qi
    out_ref  : (1, 1, P)    max_q CX[b, p, q]   (written on the last q block)
    tn_ref   : (C, P) bf16  scratch: centered+normalized target, cached per batch
    acc_ref  : (1, P) f32   scratch: running max over q blocks
    """
    qi = pl.program_id(1)

    @pl.when(qi == 0)
    def _init():
        t = t_ref[0] - mean_ref[...]                                    # (C, P)
        t = t * jax.lax.rsqrt(jnp.sum(t * t, axis=0, keepdims=True))    # L2 over C
        tn_ref[...] = t.astype(tn_ref.dtype)                            # bf16 MXU operand
        acc_ref[...] = jnp.zeros_like(acc_ref)                          # CX >= 0

    x = x_ref[0] - mean_ref[...]                                        # (C, Tq)
    x = x * jax.lax.rsqrt(jnp.sum(x * x, axis=0, keepdims=True))
    xb = x.astype(jnp.bfloat16)

    # dist[q, p] = sum_c I[c, q] * T[c, p]  (the F.conv2d 1x1 patch correlation),
    # contracting the C (sublane) axis of both operands on the MXU, fp32 accum.
    dist = jax.lax.dot_general(
        xb, tn_ref[...], (((0,), (0,)), ((), ())),
        preferred_element_type=jnp.float32)                             # (Tq, P)

    raw = (1.0 - dist) * 0.5
    # relative distance: min over the target-patch (lane) axis -- complete per block
    inv_div = pl.reciprocal(jnp.min(raw, axis=-1, keepdims=True) + EPS_REL,
                            approx=True)                                # (Tq, 1)
    # W = exp((b - raw/div)/sigma); the exp(b/sigma) factor cancels in W / W_sum:
    w = jnp.exp(raw * (inv_div * (-1.0 / SIGMA)))                       # (Tq, P)
    inv_wsum = pl.reciprocal(jnp.sum(w, axis=-1, keepdims=True), approx=True)
    cx = w * inv_wsum                                                   # (Tq, P)

    # running max over inference positions q (the tiled grid axis)
    acc_ref[...] = jnp.maximum(acc_ref[...], jnp.max(cx, axis=0, keepdims=True))

    @pl.when(qi == pl.num_programs(1) - 1)
    def _store():
        out_ref[0] = acc_ref[...]


def _pick_tq(P):
    """q-block size: full P when small, else a lane-aligned divisor of P."""
    if P <= 512:
        return P
    for t in (512, 256, 128):
        if P % t == 0:
            return t
    return P   # fallback: untiled (P not a multiple of 128)


def cx_loss(featureT, featureI):
    """CXLoss.forward(featureT, featureI) -> scalar loss, NCHW inputs."""
    N, C, H, W = featureT.shape
    P = H * W
    tq = _pick_tq(P)
    nq = P // tq

    # center_by_T needs a cross-batch mean of the target -> tiny JAX reduction;
    # everything else (centering, normalization, correlation, CX) runs in-kernel.
    meanT = jnp.mean(featureT, axis=(0, 2, 3), dtype=jnp.float32).reshape(C, 1)
    fT = featureT.reshape(N, C, P)       # free reshape; no transpose / extra copy
    fI = featureI.reshape(N, C, P)

    maxq = pl.pallas_call(
        _cx_kernel,
        out_shape=jax.ShapeDtypeStruct((N, 1, P), jnp.float32),
        grid_spec=pltpu.PrefetchScalarGridSpec(
            num_scalar_prefetch=0,
            grid=(N, nq),                                    # q (reduction) axis last
            in_specs=[
                pl.BlockSpec((C, 1), lambda b, qi: (0, 0)),
                pl.BlockSpec((1, C, P), lambda b, qi: (b, 0, 0)),
                pl.BlockSpec((1, C, tq), lambda b, qi: (b, 0, qi)),
            ],
            out_specs=pl.BlockSpec((1, 1, P), lambda b, qi: (b, 0, 0)),
            scratch_shapes=[
                pltpu.VMEM((C, P), jnp.bfloat16),            # normalized target cache
                pltpu.VMEM((1, P), jnp.float32),             # running max accumulator
            ]),
        compiler_params=pltpu.CompilerParams(
            dimension_semantics=("parallel", "arbitrary"),   # batch axis -> megacore
            vmem_limit_bytes=64 * 1024 * 1024),
    )(meanT, fT, fI)                                         # (N, 1, P)

    cx_per_batch = jnp.mean(maxq[:, 0, :], axis=-1)          # mean over target patches
    return jnp.mean(-jnp.log(cx_per_batch + EPS_LOG))


def cx_loss_ref(featureT, featureI):
    """Pure-JAX fp32 reference mirroring the PyTorch module, for validation."""
    N, C, H, W = featureT.shape
    P = H * W
    meanT = jnp.mean(featureT, axis=(0, 2, 3), keepdims=True)
    fT = featureT - meanT
    fI = featureI - meanT
    fT = fT / jnp.linalg.norm(fT, axis=1, keepdims=True)
    fI = fI / jnp.linalg.norm(fI, axis=1, keepdims=True)
    T = fT.reshape(N, C, P)
    I = fI.reshape(N, C, P)
    dist = jnp.einsum('ncp,ncq->npq', T, I)
    raw = (1.0 - dist) / 2.0
    rel = raw / (jnp.min(raw, axis=1, keepdims=True) + EPS_REL)
    w = jnp.exp((B_CONST - rel) / SIGMA)
    cx = w / jnp.sum(w, axis=1, keepdims=True)
    cx = jnp.mean(jnp.max(cx, axis=2), axis=1)
    return jnp.mean(-jnp.log(cx + EPS_LOG))


if __name__ == "__main__":
    key = jax.random.PRNGKey(0)
    k1, k2 = jax.random.split(key)
    N, C, H, W = 2, 16, 8, 8
    featureT = jax.random.normal(k1, (N, C, H, W), dtype=jnp.float32)
    featureI = jax.random.normal(k2, (N, C, H, W), dtype=jnp.float32)

    out = jax.jit(cx_loss)(featureT, featureI)
    out = jax.block_until_ready(out)

    ref = cx_loss_ref(featureT, featureI)
    # bf16 MXU operands + approximate EUP reciprocals perturb the raw/div ratio
    # (and hence CX) at the ~1% level, so validate against the exact-fp32
    # reference at a correspondingly loosened tolerance.
    assert jnp.isfinite(out), out
    assert jnp.allclose(out, ref, atol=5e-2, rtol=5e-2), (out, ref)
    print("KERNEL_OK")
</pallas_src>

<mosaic_0001>
module attributes {stable_mosaic.version = 11 : i64} {
  func.func @_cx_kernel(%arg0: i32, %arg1: i32, %arg2: memref<16x1xf32, #tpu.memory_space<vmem>>, %arg3: memref<1x16x64xf32, #tpu.memory_space<vmem>>, %arg4: memref<1x16x64xf32, #tpu.memory_space<vmem>>, %arg5: memref<1x1x64xf32, #tpu.memory_space<vmem>>, %arg6: memref<16x64xbf16, #tpu.memory_space<vmem>>, %arg7: memref<1x64xf32, #tpu.memory_space<vmem>>) attributes {dimension_semantics = [#tpu.dimension_semantics<parallel>, #tpu.dimension_semantics<arbitrary>], iteration_bounds = array<i64: 2, 1>, scalar_prefetch = 0 : i64, scratch_operands = 2 : i64, tpu.core_type = #tpu.core_type<tc>, window_params = [{pipeline_mode = #tpu.pipeline_mode<synchronous>, transform_indices = @transform_0, window_bounds = array<i64: 16, 1>}, {transform_indices = @transform_1, window_bounds = array<i64: 1, 16, 64>}, {transform_indices = @transform_2, window_bounds = array<i64: 1, 16, 64>}, {transform_indices = @transform_3, window_bounds = array<i64: 1, 1, 64>}]} {
    %c0_i32 = arith.constant 0 : i32
    %0 = arith.cmpi eq, %arg1, %c0_i32 : i32
    %1 = arith.extui %0 : i1 to i32
    %c0_i32_0 = arith.constant 0 : i32
    %2 = arith.cmpi ne, %1, %c0_i32_0 : i32
    scf.if %2 {
      %c0_21 = arith.constant 0 : index
      %c0_22 = arith.constant 0 : index
      %c0_23 = arith.constant 0 : index
      %44 = vector.load %arg3[%c0_21, %c0_22, %c0_23] : memref<1x16x64xf32, #tpu.memory_space<vmem>>, vector<1x16x64xf32>
      %45 = vector.shape_cast %44 : vector<1x16x64xf32> to vector<16x64xf32>
      %c0_24 = arith.constant 0 : index
      %c0_25 = arith.constant 0 : index
      %46 = vector.load %arg2[%c0_24, %c0_25] : memref<16x1xf32, #tpu.memory_space<vmem>>, vector<16x1xf32>
      %47 = vector.broadcast %46 : vector<16x1xf32> to vector<16x64xf32>
      %48 = arith.subf %45, %47 : vector<16x64xf32>
      %49 = arith.mulf %48, %48 : vector<16x64xf32>
      %cst_26 = arith.constant dense<0.000000e+00> : vector<64xf32>
      %50 = vector.multi_reduction <add>, %49, %cst_26 [0] : vector<16x64xf32> to vector<64xf32>
      %51 = vector.shape_cast %50 : vector<64xf32> to vector<1x64xf32>
      %52 = math.rsqrt %51 : vector<1x64xf32>
      %53 = vector.broadcast %52 : vector<1x64xf32> to vector<16x64xf32>
      %54 = arith.mulf %48, %53 : vector<16x64xf32>
      %55 = arith.truncf %54 : vector<16x64xf32> to vector<16x64xbf16>
      %c0_27 = arith.constant 0 : index
      %c0_28 = arith.constant 0 : index
      %56 = vector.load %arg6[%c0_27, %c0_28] : memref<16x64xbf16, #tpu.memory_space<vmem>>, vector<16x64xbf16>
      tpu.vector_store %arg6[%c0_27, %c0_28], %55 {strides = array<i32>} : memref<16x64xbf16, #tpu.memory_space<vmem>>, vector<16x64xbf16>,
      %cst_29 = arith.constant 0.000000e+00 : f32
      %57 = vector.broadcast %cst_29 : f32 to vector<1x64xf32>
      %c0_30 = arith.constant 0 : index
      %c0_31 = arith.constant 0 : index
      %58 = vector.load %arg7[%c0_30, %c0_31] : memref<1x64xf32, #tpu.memory_space<vmem>>, vector<1x64xf32>
      tpu.vector_store %arg7[%c0_30, %c0_31], %57 {strides = array<i32>} : memref<1x64xf32, #tpu.memory_space<vmem>>, vector<1x64xf32>,
    } else {
    }
    %c0 = arith.constant 0 : index
    %c0_1 = arith.constant 0 : index
    %c0_2 = arith.constant 0 : index
    %3 = vector.load %arg4[%c0, %c0_1, %c0_2] : memref<1x16x64xf32, #tpu.memory_space<vmem>>, vector<1x16x64xf32>
    %4 = vector.shape_cast %3 : vector<1x16x64xf32> to vector<16x64xf32>
    %c0_3 = arith.constant 0 : index
    %c0_4 = arith.constant 0 : index
    %5 = vector.load %arg2[%c0_3, %c0_4] : memref<16x1xf32, #tpu.memory_space<vmem>>, vector<16x1xf32>
    %6 = vector.broadcast %5 : vector<16x1xf32> to vector<16x64xf32>
    %7 = arith.subf %4, %6 : vector<16x64xf32>
    %8 = arith.mulf %7, %7 : vector<16x64xf32>
    %cst = arith.constant dense<0.000000e+00> : vector<64xf32>
    %9 = vector.multi_reduction <add>, %8, %cst [0] : vector<16x64xf32> to vector<64xf32>
    %10 = vector.shape_cast %9 : vector<64xf32> to vector<1x64xf32>
    %11 = math.rsqrt %10 : vector<1x64xf32>
    %12 = vector.broadcast %11 : vector<1x64xf32> to vector<16x64xf32>
    %13 = arith.mulf %7, %12 : vector<16x64xf32>
    %14 = arith.truncf %13 : vector<16x64xf32> to vector<16x64xbf16>
    %c0_5 = arith.constant 0 : index
    %c0_6 = arith.constant 0 : index
    %15 = vector.load %arg6[%c0_5, %c0_6] : memref<16x64xbf16, #tpu.memory_space<vmem>>, vector<16x64xbf16>
    %cst_7 = arith.constant dense<0.000000e+00> : vector<64x64xf32>
    %16 = tpu.matmul %14, %15, %cst_7 {dimension_numbers = #tpu.dot_dimension_numbers<[0], [0], [1], [1], [0, 1, 1, 1], [], []>} : vector<16x64xbf16>, vector<16x64xbf16>, vector<64x64xf32> -> vector<64x64xf32>
    %cst_8 = arith.constant 1.000000e+00 : f32
    %17 = vector.broadcast %cst_8 : f32 to vector<64x64xf32>
    %18 = arith.subf %17, %16 : vector<64x64xf32>
    %cst_9 = arith.constant 5.000000e-01 : f32
    %19 = vector.broadcast %cst_9 : f32 to vector<64x64xf32>
    %20 = arith.mulf %18, %19 : vector<64x64xf32>
    %cst_10 = arith.constant dense<0x7F800000> : vector<64xf32>
    %21 = vector.multi_reduction <minimumf>, %20, %cst_10 [1] : vector<64x64xf32> to vector<64xf32>
    %22 = vector.shape_cast %21 : vector<64xf32> to vector<64x1xf32>
    %cst_11 = arith.constant 9.99999974E-6 : f32
    %23 = vector.broadcast %cst_11 : f32 to vector<64x1xf32>
    %24 = arith.addf %22, %23 : vector<64x1xf32>
    %25 = tpu.reciprocal %24 {approx = true} : vector<64x1xf32> -> vector<64x1xf32>
    %cst_12 = arith.constant -2.000000e+00 : f32
    %26 = vector.broadcast %cst_12 : f32 to vector<64x1xf32>
    %27 = arith.mulf %25, %26 : vector<64x1xf32>
    %28 = vector.broadcast %27 : vector<64x1xf32> to vector<64x64xf32>
    %29 = arith.mulf %20, %28 : vector<64x64xf32>
    %30 = math.exp %29 : vector<64x64xf32>
    %cst_13 = arith.constant dense<0.000000e+00> : vector<64xf32>
    %31 = vector.multi_reduction <add>, %30, %cst_13 [1] : vector<64x64xf32> to vector<64xf32>
    %32 = vector.shape_cast %31 : vector<64xf32> to vector<64x1xf32>
    %33 = tpu.reciprocal %32 {approx = true} : vector<64x1xf32> -> vector<64x1xf32>
    %34 = vector.broadcast %33 : vector<64x1xf32> to vector<64x64xf32>
    %35 = arith.mulf %30, %34 : vector<64x64xf32>
    %c0_14 = arith.constant 0 : index
    %c0_15 = arith.constant 0 : index
    %36 = vector.load %arg7[%c0_14, %c0_15] : memref<1x64xf32, #tpu.memory_space<vmem>>, vector<1x64xf32>
    %cst_16 = arith.constant dense<0xFF800000> : vector<64xf32>
    %37 = vector.multi_reduction <maximumf>, %35, %cst_16 [0] : vector<64x64xf32> to vector<64xf32>
    %38 = vector.shape_cast %37 : vector<64xf32> to vector<1x64xf32>
    %39 = arith.maximumf %36, %38 : vector<1x64xf32>
    %c0_17 = arith.constant 0 : index
    %c0_18 = arith.constant 0 : index
    %40 = vector.load %arg7[%c0_17, %c0_18] : memref<1x64xf32, #tpu.memory_space<vmem>>, vector<1x64xf32>
    tpu.vector_store %arg7[%c0_17, %c0_18], %39 {strides = array<i32>} : memref<1x64xf32, #tpu.memory_space<vmem>>, vector<1x64xf32>,
    %c0_i32_19 = arith.constant 0 : i32
    %41 = arith.cmpi eq, %arg1, %c0_i32_19 : i32
    %42 = arith.extui %41 : i1 to i32
    %c0_i32_20 = arith.constant 0 : i32
    %43 = arith.cmpi ne, %42, %c0_i32_20 : i32
    scf.if %43 {
      %c0_21 = arith.constant 0 : index
      %c0_22 = arith.constant 0 : index
      %44 = vector.load %arg7[%c0_21, %c0_22] : memref<1x64xf32, #tpu.memory_space<vmem>>, vector<1x64xf32>
      %c0_23 = arith.constant 0 : index
      %c0_24 = arith.constant 0 : index
      %c0_25 = arith.constant 0 : index
      %45 = vector.load %arg5[%c0_23, %c0_24, %c0_25] : memref<1x1x64xf32, #tpu.memory_space<vmem>>, vector<1x1x64xf32>
      %46 = vector.shape_cast %45 : vector<1x1x64xf32> to vector<1x64xf32>
      %47 = vector.shape_cast %44 : vector<1x64xf32> to vector<1x1x64xf32>
      tpu.vector_store %arg5[%c0_23, %c0_24, %c0_25], %47 {strides = array<i32>} : memref<1x1x64xf32, #tpu.memory_space<vmem>>, vector<1x1x64xf32>,
    } else {
    }
    return
  }
  func.func @transform_0(%arg0: i32, %arg1: i32) -> (i32, i32) {
    %c0_i32 = arith.constant 0 : i32
    %c0_i32_0 = arith.constant 0 : i32
    %c0_i32_1 = arith.constant 0 : i32
    return %c0_i32, %c0_i32_0 : i32, i32
  }
  func.func @transform_1(%arg0: i32, %arg1: i32) -> (i32, i32, i32) {
    %c0_i32 = arith.constant 0 : i32
    %c0_i32_0 = arith.constant 0 : i32
    %c0_i32_1 = arith.constant 0 : i32
    return %arg0, %c0_i32, %c0_i32_0 : i32, i32, i32
  }
  func.func @transform_2(%arg0: i32, %arg1: i32) -> (i32, i32, i32) {
    %c0_i32 = arith.constant 0 : i32
    %c0_i32_0 = arith.constant 0 : i32
    return %arg0, %c0_i32, %arg1 : i32, i32, i32
  }
  func.func @transform_3(%arg0: i32, %arg1: i32) -> (i32, i32, i32) {
    %c0_i32 = arith.constant 0 : i32
    %c0_i32_0 = arith.constant 0 : i32
    %c0_i32_1 = arith.constant 0 : i32
    return %arg0, %c0_i32, %c0_i32_0 : i32, i32, i32
  }
}

</mosaic_0001>

<llo_original>
// kernel: cx_loss.1
$region0: #{cx_loss.1}
  #allocation0 [shape = 'u32[]', space=smem, size = 0x4, offset = 0x4, fixed_abs, tag = 'smem constant byte address 0x4 - core index']
  #allocation1 [shape = 'u32[144,128]{1,0:T(1,128)}', space=vmem, size = 0x12000, scoped, tag = 'internal scratch']
  #allocation2 [shape = 'bf16[16,64]{1,0:T(16,128)(2,1)}', space=vmem, size = 0x1000, scoped, tag = 'scratch operand']
  #allocation3 [shape = 'f32[1,64]{1,0:T(1,128)}', space=vmem, size = 0x200, scoped, tag = 'scratch operand']
  %s0 = inlined_call_operand.hbm [shape: f32[16,1], index: 0, kind: input, shape index: {}]
  %s1 = inlined_call_operand.hbm [shape: f32[2,16,64], index: 1, kind: input, shape index: {}]
  %s2 = inlined_call_operand.hbm [shape: f32[2,16,64], index: 2, kind: input, shape index: {}]
  %s3 = inlined_call_operand.hbm [shape: f32[2,1,64], index: 3, kind: output, shape index: {}]
  %s4 = sld [smem:[#allocation0]]
  $region65: #{cx_loss.1} parent=0
    _
  %s6 = ssub.s32 1, %s4
  %s7 = scalar_select 0, %s6, %s4
  $region1: #{cx_loss.1} parent=0
    #allocation4 [shape = 'u8[8192]{0}', space=vmem, size = 0x2000, scoped, tag = 'input window, operand 0, single buffered']
    #allocation5 [shape = 's32[2]{0}', space=sflag, size = 0x8, scoped, tag = 'scoped memory for cx_loss.1']
    #allocation6 [shape = 's32[2]{0}', space=sflag, size = 0x8, scoped, tag = 'scoped memory for cx_loss.1']
    #allocation7 [shape = 'u8[16384]{0}', space=vmem, size = 0x4000, scoped, tag = 'input window, operand 1']
    #allocation8 [shape = 's32[2]{0}', space=sflag, size = 0x8, scoped, tag = 'scoped memory for cx_loss.1']
    #allocation9 [shape = 'u8[16384]{0}', space=vmem, size = 0x4000, scoped, tag = 'input window, operand 2']
    #allocation10 [shape = 'u8[1024]{0}', space=vmem, size = 0x400, scoped, tag = 'output window, operand 0']
    %8 = vsyncpa [#allocation5], 0
    %9 = vsyncpa [#allocation8], 0
    %s10 = scalar_lea.sflag [#allocation8], 1
    %11 = vsyncpa %s10, 0
    %12 = vsyncpa [#allocation6], 0
    %s13 = scalar_lea.sflag [#allocation6], 1
    %14 = vsyncpa %s13, 0
    loop: start=0, step=1, limit=4
    $region2: #{cx_loss.1} parent=1 // loop_pre_header
      _
    $region3: #{cx_loss.1} parent=1 // loop_header
      %s16 = sphi 0, %s20
      %p17 = scmp.ge.s32.totalorder %s16, 4
      %s23 = sphi 0, %s35
      %s24 = sphi 0, %s31
      %s25 = sphi 0, %s23
      %s26 = sphi 0, %s24
      %s27 = sphi 0, %s25
      %s28 = sphi 0, %s26
      %s36 = sphi 0, %s36
      %s38 = sphi 0, %s36
      %s39 = sphi 0, %s38
      %s53 = sphi 0, %s39
      %s59 = sphi 0, %s61
      %s62 = sphi 0, %s59
      %s63 = sphi 0, %s62
      %s79 = sphi 0, %s63
      %s87 = sphi 0, %s89
      %s90 = sphi 0, %s87
      %s91 = sphi 0, %s90
      %s107 = sphi 0, %s91
      %s113 = sphi 0, %s115
      %s116 = sphi 0, %s113
      %s117 = sphi 0, %s116
      %s133 = sphi 0, %s117
    $region4: #{cx_loss.1} parent=1 // loop_header_branch
      %19 = sbr.rel (%p17) target = $region8
    $region5: #{cx_loss.1} parent=1 // loop_body
      %s21 = ssub.s32 %s16, 1
      %s22 = ssub.s32 %s16, 2
      %s29 = sadd.s32 1, %s24
      %p30 = scmp.ge.s32.totalorder %s29, 1
      %s31 = scalar_select %p30, 0, %s29
      %s32 = sadd.s32 1, %s23
      %s33 = scalar_select %p30, %s32, %s23
      %p34 = scmp.ge.s32.totalorder %s33, 2
      %s35 = scalar_select %p34, 0, %s33
      %s37 = sadd.s32 %s36, 1
      %p40 = scmp.eq.s32.totalorder %s16, 1
      %p41 = scmp.ne.s32.totalorder %s36, %s38
      %p42 = scmp.eq.s32.totalorder %s16, 0
      %p43 = por %p41, %p42
      %p44 = scmp.ne.s32.totalorder %s36, %s38
      %p45 = scmp.eq.s32.totalorder %s21, 1
      %p46 = por %p44, %p45
      %p47 = scmp.ne.s32.totalorder %s38, %s39
      %p48 = scmp.eq.s32.totalorder %s21, 0
      %p49 = por %p47, %p48
      %p50 = scmp.ne.s32.totalorder %s38, %s39
      %p51 = scmp.eq.s32.totalorder %s22, 1
      %p52 = por %p50, %p51
      %p54 = scmp.ne.s32.totalorder %s39, %s53
      %p55 = scmp.eq.s32.totalorder %s22, 0
      %p56 = por %p54, %p55
      %s57 = ssub.s32 %s23, %s35
      %p58 = scmp.eq.s32.totalorder %s57, 0
      %s60 = sadd.s32 %s59, 1
      %s61 = scalar_select %p58, %s59, %s60
      %p64 = pneg %p58
      %p65 = scmp.eq.s32.totalorder %s16, 1
      %p66 = por %p64, %p65
      %p67 = scmp.ne.s32.totalorder %s59, %s62
      %p68 = scmp.eq.s32.totalorder %s16, 0
      %p69 = por %p67, %p68
      %p70 = scmp.ne.s32.totalorder %s59, %s62
      %p71 = scmp.eq.s32.totalorder %s21, 1
      %p72 = por %p70, %p71
      %p73 = scmp.ne.s32.totalorder %s62, %s63
      %p74 = scmp.eq.s32.totalorder %s21, 0
      %p75 = por %p73, %p74
      %p76 = scmp.ne.s32.totalorder %s62, %s63
      %p77 = scmp.eq.s32.totalorder %s22, 1
      %p78 = por %p76, %p77
      %p80 = scmp.ne.s32.totalorder %s63, %s79
      %p81 = scmp.eq.s32.totalorder %s22, 0
      %p82 = por %p80, %p81
      %s83 = ssub.s32 %s23, %s35
      %s84 = ssub.s32 %s24, %s31
      %s85 = sor.u32 %s83, %s84
      %p86 = scmp.eq.s32.totalorder %s85, 0
      %s88 = sadd.s32 %s87, 1
      %s89 = scalar_select %p86, %s87, %s88
      %p92 = pneg %p86
      %p93 = scmp.eq.s32.totalorder %s16, 1
      %p94 = por %p92, %p93
      %p95 = scmp.ne.s32.totalorder %s87, %s90
      %p96 = scmp.eq.s32.totalorder %s16, 0
      %p97 = por %p95, %p96
      %p98 = scmp.ne.s32.totalorder %s87, %s90
      %p99 = scmp.eq.s32.totalorder %s21, 1
      %p100 = por %p98, %p99
      %p101 = scmp.ne.s32.totalorder %s90, %s91
      %p102 = scmp.eq.s32.totalorder %s21, 0
      %p103 = por %p101, %p102
      %p104 = scmp.ne.s32.totalorder %s90, %s91
      %p105 = scmp.eq.s32.totalorder %s22, 1
      %p106 = por %p104, %p105
      %p108 = scmp.ne.s32.totalorder %s91, %s107
      %p109 = scmp.eq.s32.totalorder %s22, 0
      %p110 = por %p108, %p109
      %s111 = ssub.s32 %s23, %s35
      %p112 = scmp.eq.s32.totalorder %s111, 0
      %s114 = sadd.s32 %s113, 1
      %s115 = scalar_select %p112, %s113, %s114
      %p118 = pneg %p112
      %p119 = scmp.eq.s32.totalorder %s16, 1
      %p120 = por %p118, %p119
      %p121 = scmp.ne.s32.totalorder %s113, %s116
      %p122 = scmp.eq.s32.totalorder %s16, 0
      %p123 = por %p121, %p122
      %p124 = scmp.ne.s32.totalorder %s113, %s116
      %p125 = scmp.eq.s32.totalorder %s21, 1
      %p126 = por %p124, %p125
      %p127 = scmp.ne.s32.totalorder %s116, %s117
      %p128 = scmp.eq.s32.totalorder %s21, 0
      %p129 = por %p127, %p128
      %p130 = scmp.ne.s32.totalorder %s116, %s117
      %p131 = scmp.eq.s32.totalorder %s22, 1
      %p132 = por %p130, %p131
      %p134 = scmp.ne.s32.totalorder %s117, %s133
      %p135 = scmp.eq.s32.totalorder %s22, 0
      %p136 = por %p134, %p135
      %p137 = scmp.le.s32.totalorder 1, %s16
      %p138 = scmp.lt.s32.totalorder %s16, 3
      %p139 = pnand %p137, %p138
      %p140 = pneg %p139
      // Predicated region
      $region9: #{cx_loss.1} parent=5 // pred_check
        _
      $region10: #{cx_loss.1} parent=5 // pred_check_branch
        %142 = sbr.rel (%p139) target = $region12
      $region11: #{cx_loss.1} parent=5 // pred_region
        %s143 = ssub.s32 %s16, 1
        // Predicated region
        $region13: #{cx_loss.1} parent=11 // pred_check
          %p144 = pneg %p49
        $region14: #{cx_loss.1} parent=11 // pred_check_branch
          %146 = sbr.rel (%p144) target = $region16
        $region15: #{cx_loss.1} parent=11 // pred_region
          %s148 = ssub.s32 256, 256
          %149 = vsyncadd [#allocation5], %s148
          %s150 = sshll.u32 [#allocation4], 4
          %s151 = int_to_ptr.vmem [resolvable:$true] %s150
          %156 = dma.hbm_to_vmem [thread:$0]  %s0, 256, %s151, [#allocation5], 128, 128, 8
        $region16: #{cx_loss.1} parent=11 // pred_fallthru
          _
      $region12: #{cx_loss.1} parent=5 // pred_fallthru
        _
      %p157 = scmp.lt.s32.totalorder %s16, 2
      // Predicated region
      $region17: #{cx_loss.1} parent=5 // pred_check
        %p158 = pneg %p157
      $region18: #{cx_loss.1} parent=5 // pred_check_branch
        %160 = sbr.rel (%p158) target = $region20
      $region19: #{cx_loss.1} parent=5 // pred_region
        // Predicated region
        $region21: #{cx_loss.1} parent=19 // pred_check
          %p161 = pneg %p69
        $region22: #{cx_loss.1} parent=19 // pred_check_branch
          %163 = sbr.rel (%p161) target = $region24
        $region23: #{cx_loss.1} parent=19 // pred_region
          %s164 = sand.u32 %s16, 1
          %s165 = scalar_lea.sflag [#allocation8], %s164
          %s166 = sand.u32 %s59, 1
          %s167 = smul.addr %s166, 16
          %s168 = scalar_lea.vmem [#allocation7], %s167
          %s170 = ssub.s32 256, 256
          %171 = vsyncadd %s165, %s170
          %s172 = smul.addr %s23, 2
          %s173 = smul.addr %s172, 128
          %s174 = scalar_lea.hbm %s1, %s173
          %s175 = sshll.u32 %s168, 4
          %s176 = int_to_ptr.vmem [resolvable:$true] %s175
          %181 = dma.hbm_to_vmem [thread:$0]  %s174, 256, %s176, %s165, 128, 128, 8
        $region24: #{cx_loss.1} parent=19 // pred_fallthru
          _
        // Predicated region
        $region25: #{cx_loss.1} parent=19 // pred_check
          %p182 = pneg %p97
        $region26: #{cx_loss.1} parent=19 // pred_check_branch
          %184 = sbr.rel (%p182) target = $region28
        $region27: #{cx_loss.1} parent=19 // pred_region
          %s185 = sand.u32 %s16, 1
          %s186 = scalar_lea.sflag [#allocation8], %s185
          %s187 = sand.u32 %s87, 1
          %s188 = smul.addr %s187, 16
          %s189 = scalar_lea.vmem [#allocation9], %s188
          %s191 = ssub.s32 256, 256
          %192 = vsyncadd %s186, %s191
          %s193 = smul.addr %s23, 2
          %s194 = sadd.s32 %s24, %s193
          %s195 = smul.addr %s194, 128
          %s196 = scalar_lea.hbm %s2, %s195
          %s197 = sshll.u32 %s189, 4
          %s198 = int_to_ptr.vmem [resolvable:$true] %s197
          %203 = dma.hbm_to_vmem [thread:$0]  %s196, 256, %s198, %s186, 128, 128, 8
        $region28: #{cx_loss.1} parent=19 // pred_fallthru
          _
      $region20: #{cx_loss.1} parent=5 // pred_fallthru
        _
      %p204 = scmp.le.s32.totalorder 1, %s16
      %p205 = scmp.lt.s32.totalorder %s16, 3
      %p206 = pnand %p204, %p205
      %p207 = pneg %p206
      // Predicated region
      $region29: #{cx_loss.1} parent=5 // pred_check
        _
      $region30: #{cx_loss.1} parent=5 // pred_check_branch
        %209 = sbr.rel (%p206) target = $region32
      $region31: #{cx_loss.1} parent=5 // pred_region
        %s210 = ssub.s32 %s16, 1
        // Predicated region
        $region33: #{cx_loss.1} parent=31 // pred_check
          %p211 = pneg %p49
        $region34: #{cx_loss.1} parent=31 // pred_check_branch
          %213 = sbr.rel (%p211) target = $region36
        $region35: #{cx_loss.1} parent=31 // pred_region
          %214 = dma.done [#allocation5], 256
        $region36: #{cx_loss.1} parent=31 // pred_fallthru
          _
        %s215 = sand.u32 %s21, 1
        %s216 = scalar_lea.sflag [#allocation8], %s215
        %s217 = sand.u32 %s62, 1
        %s218 = smul.addr %s217, 16
        %s219 = scalar_lea.vmem [#allocation7], %s218
        // Predicated region
        $region37: #{cx_loss.1} parent=31 // pred_check
          %p220 = pneg %p75
        $region38: #{cx_loss.1} parent=31 // pred_check_branch
          %222 = sbr.rel (%p220) target = $region40
        $region39: #{cx_loss.1} parent=31 // pred_region
          %223 = dma.done %s216, 256
        $region40: #{cx_loss.1} parent=31 // pred_fallthru
          _
        %s224 = sand.u32 %s21, 1
        %s225 = scalar_lea.sflag [#allocation8], %s224
        %s226 = sand.u32 %s90, 1
        %s227 = smul.addr %s226, 16
        %s228 = scalar_lea.vmem [#allocation9], %s227
        // Predicated region
        $region41: #{cx_loss.1} parent=31 // pred_check
          %p229 = pneg %p103
        $region42: #{cx_loss.1} parent=31 // pred_check_branch
          %231 = sbr.rel (%p229) target = $region44
        $region43: #{cx_loss.1} parent=31 // pred_region
          %232 = dma.done %s225, 256
        $region44: #{cx_loss.1} parent=31 // pred_fallthru
          _
        %p233 = pneg %p49
        %p234 = pneg %p46
        %s235 = sand.u32 %s21, 1
        %s236 = scalar_lea.sflag [#allocation8], %s235
        %s237 = sand.u32 %s62, 1
        %s238 = smul.addr %s237, 16
        %s239 = scalar_lea.vmem [#allocation7], %s238
        %p240 = pneg %p75
        %p241 = pneg %p72
        %s242 = sand.u32 %s21, 1
        %s243 = scalar_lea.sflag [#allocation8], %s242
        %s244 = sand.u32 %s90, 1
        %s245 = smul.addr %s244, 16
        %s246 = scalar_lea.vmem [#allocation9], %s245
        %p247 = pneg %p103
        %p248 = pneg %p100
        %p249 = pneg %p129
        %p250 = pneg %p126
        %s251 = sand.u32 %s116, 1
        %s252 = scalar_lea.sflag [#allocation6], %s251
        %s253 = sand.u32 %s116, 1
        %s254 = scalar_lea.vmem [#allocation10], %s253
        %p256 = scmp.eq.s32.totalorder %s26, 0
        // Predicated region
        $region45: #{cx_loss.1} parent=31 // pred_check
          %p257 = pneg %p256
        $region46: #{cx_loss.1} parent=31 // pred_check_branch
          %259 = sbr.rel (%p257) target = $region48
        $region47: #{cx_loss.1} parent=31 // pred_region
          %v260 = vld [vmem:[%s219] sm:$0xff]
          %v261 = vld [vmem:[%s219 + $0x8] sm:$0xff]
          %v262 = vld [vmem:[#allocation4] sm:$0xff]
          %v263 = vld [vmem:[#allocation4 + $0x8] sm:$0xff]
          %265 = vset.pattern.permute.xlu0 0
          %266 = vperm.xlu0 %265, %v262
          %v267 = vpop.permute.xlu0 %266
          %270 = vset.pattern.permute.xlu0 0
          %271 = vperm.xlu0 %270, %v263
          %v272 = vpop.permute.xlu0 %271
          %v274 = vsub.f32 %v260, %v267
          %v275 = vsub.f32 %v261, %v272
          %v276 = vmul.f32 %v274, %v274
          %v277 = vmul.f32 %v275, %v275
          %vm278 = vcmask 523264
          %v279 = vsel %vm278, %v276, 0.0
          %v280 = vsel %vm278, %v277, 0.0
          %v281 = vadd.f32 %v279, %v280
          %v282 = vrot.slane %v281, 4
          %v283 = vadd.f32 %v281, %v282
          %v284 = vrot.slane %v283, 2
          %v285 = vadd.f32 %v283, %v284
          %v286 = vrot.slane %v285, 1
          %v287 = vadd.f32 %v285, %v286
          %v288 = vrsqrt.pop %v287
          %v289 = vmul.f32 %v274, %v288
          %v290 = vmul.f32 %v275, %v288
          %v291 = vpack.c.bf16 %v290, %v289
          %292 = vst.msk [vmem:[#allocation2] sm:$0xff] %vm278, %v291
          %vm293 = vcmask 516096
          %294 = vst.msk [vmem:[#allocation3] sm:$0x1] %vm293, 0.0
        $region48: #{cx_loss.1} parent=31 // pred_fallthru
          _
        %v295 = vld [vmem:[%s228] sm:$0xff]
        %v296 = vld [vmem:[%s228 + $0x8] sm:$0xff]
        %v297 = vld [vmem:[#allocation4] sm:$0xff]
        %v298 = vld [vmem:[#allocation4 + $0x8] sm:$0xff]
        %300 = vset.pattern.permute.xlu0 0
        %301 = vperm.xlu0 %300, %v297
        %v302 = vpop.permute.xlu0 %301
        %305 = vset.pattern.permute.xlu0 0
        %306 = vperm.xlu0 %305, %v298
        %v307 = vpop.permute.xlu0 %306
        %v309 = vsub.f32 %v295, %v302
        %v310 = vsub.f32 %v296, %v307
        %v311 = vmul.f32 %v309, %v309
        %v312 = vmul.f32 %v310, %v310
        %vm313 = vcmask 523264
        %v314 = vsel %vm313, %v311, 0.0
        %v315 = vsel %vm313, %v312, 0.0
        %v316 = vadd.f32 %v314, %v315
        %v317 = vrot.slane %v316, 4
        %v318 = vadd.f32 %v316, %v317
        %v319 = vrot.slane %v318, 2
        %v320 = vadd.f32 %v318, %v319
        %v321 = vrot.slane %v320, 1
        %v322 = vadd.f32 %v320, %v321
        %v323 = vrsqrt.pop %v322
        %v324 = vmul.f32 %v309, %v323
        %v325 = vmul.f32 %v310, %v323
        %v326 = vpack.c.bf16 %v325, %v324
        %v327 = vld [vmem:[#allocation2] sm:$0xff]
        %328 = vxpose.xlu0.c.b16.start [1/8] %v326, 128
        %329 = vxpose.xlu0.c.b16.cont [2/8] 0, 128
        %330 = vxpose.xlu0.c.b16.cont [3/8] 0, 128
        %331 = vxpose.xlu0.c.b16.cont [4/8] 0, 128
        %332 = vxpose.xlu0.c.b16.cont [5/8] 0, 128
        %333 = vxpose.xlu0.c.b16.cont [6/8] 0, 128
        %334 = vxpose.xlu0.c.b16.cont [7/8] 0, 128
        %335 = vxpose.xlu0.c.b16.end [8/8] 0, 128
        %v336 = vpop.trf.xlu0
        %v337 = vpop.trf.xlu0
        %v338 = vpop.trf.xlu0
        %v339 = vpop.trf.xlu0
        %v340 = vpop.trf.xlu0
        %v341 = vpop.trf.xlu0
        %v342 = vpop.trf.xlu0
        %v343 = vpop.trf.xlu0
        %vm344 = vcmask 130048
        %v346 = vsel %vm344, %v336, 0
        %v349 = vsel %vm344, %v337, 0
        %v352 = vsel %vm344, %v338, 0
        %v355 = vsel %vm344, %v339, 0
        %357 = vmatprep.subr.bf16.mxu0 0
        %358 = vmatpush1.bf16.msra.mxu0 %v327
        %359 = vmatprep.subr.bf16.mxu0 0
        %360 = vmatpush1.bf16.msra.mxu0 0
        %361 = vmatprep.subr.bf16.mxu0 0
        %362 = vmatpush1.bf16.msra.mxu0 0
        %363 = vmatprep.subr.bf16.mxu0 0
        %364 = vmatpush1.bf16.msra.mxu0 0
        %365 = vmatprep.subr.bf16.mxu0 0
        %366 = vmatpush1.bf16.msra.mxu0 0
        %367 = vmatprep.subr.bf16.mxu0 0
        %368 = vmatpush1.bf16.msra.mxu0 0
        %369 = vmatprep.subr.bf16.mxu0 0
        %370 = vmatpush1.bf16.msra.mxu0 0
        %371 = vmatprep.subr.bf16.mxu0 0
        %372 = vmatpush1.bf16.msra.mxu0 0
        %373 = vmatprep.subr.bf16.mxu0 0
        %374 = vmatpush1.bf16.msra.mxu0 0
        %375 = vmatprep.subr.bf16.mxu0 0
        %376 = vmatpush1.bf16.msra.mxu0 0
        %377 = vmatprep.subr.bf16.mxu0 0
        %378 = vmatpush1.bf16.msra.mxu0 0
        %379 = vmatprep.subr.bf16.mxu0 0
        %380 = vmatpush1.bf16.msra.mxu0 0
        %381 = vmatprep.subr.bf16.mxu0 0
        %382 = vmatpush1.bf16.msra.mxu0 0
        %383 = vmatprep.subr.bf16.mxu0 0
        %384 = vmatpush1.bf16.msra.mxu0 0
        %385 = vmatprep.subr.bf16.mxu0 0
        %386 = vmatpush1.bf16.msra.mxu0 0
        %387 = vmatprep.subr.bf16.mxu0 0
        %388 = vmatpush1.bf16.msra.mxu0 0
        %389 = vmatprep.mubr.bf16.mxu0 0
        %390 = vmatmul.mubr.bf16.gmra.mrb[0].mxu0 %v346
        %v391 = vpop.f32.mrb[0].mxu0
        %v392 = vadd.f32 0.0, %v391
        %v393 = vpop.f32.mrb[0].mxu0
        %v394 = vpop.f32.mrb[0].mxu0
        %v395 = vadd.f32 0.0, %v394
        %v396 = vpop.f32.mrb[0].mxu0
        %397 = vmatprep.mubr.bf16.mxu0 0
        %398 = vmatmul.mubr.bf16.gmra.mrb[0].mxu0 %v349
        %v399 = vpop.f32.mrb[0].mxu0
        %v400 = vadd.f32 0.0, %v399
        %v401 = vpop.f32.mrb[0].mxu0
        %v402 = vpop.f32.mrb[0].mxu0
        %v403 = vadd.f32 0.0, %v402
        %v404 = vpop.f32.mrb[0].mxu0
        %405 = vmatprep.mubr.bf16.mxu0 0
        %406 = vmatmul.mubr.bf16.gmra.mrb[0].mxu0 %v352
        %v407 = vpop.f32.mrb[0].mxu0
        %v408 = vadd.f32 0.0, %v407
        %v409 = vpop.f32.mrb[0].mxu0
        %v410 = vpop.f32.mrb[0].mxu0
        %v411 = vadd.f32 0.0, %v410
        %v412 = vpop.f32.mrb[0].mxu0
        %413 = vmatprep.mubr.bf16.mxu0 0
        %414 = vmatmul.mubr.bf16.gmra.mrb[0].mxu0 %v355
        %v415 = vpop.f32.mrb[0].mxu0
        %v416 = vadd.f32 0.0, %v415
        %v417 = vpop.f32.mrb[0].mxu0
        %v418 = vpop.f32.mrb[0].mxu0
        %v419 = vadd.f32 0.0, %v418
        %v420 = vpop.f32.mrb[0].mxu0
        %421 = vdwg.mxu0
        %v422 = vsub.f32 1.0, %v392
        %v423 = vsub.f32 1.0, %v395
        %v424 = vsub.f32 1.0, %v400
        %v425 = vsub.f32 1.0, %v403
        %v426 = vsub.f32 1.0, %v408
        %v427 = vsub.f32 1.0, %v411
        %v428 = vsub.f32 1.0, %v416
        %v429 = vsub.f32 1.0, %v419
        %v430 = vmul.f32 %v422, 0.5
        %v431 = vmul.f32 %v423, 0.5
        %v432 = vmul.f32 %v424, 0.5
        %v433 = vmul.f32 %v425, 0.5
        %v434 = vmul.f32 %v426, 0.5
        %v435 = vmul.f32 %v427, 0.5
        %v436 = vmul.f32 %v428, 0.5
        %v437 = vmul.f32 %v429, 0.5
        %v438 = vsel %vm313, %v430, inf
        %439 = vmin.xlane.f32.xlu0 %v438
        %v440 = vpop.xlane.xlu0 %439
        %v441 = vsel %vm313, %v431, inf
        %442 = vmin.xlane.f32.xlu0 %v441
        %v443 = vpop.xlane.xlu0 %442
        %v444 = vsel %vm313, %v432, inf
        %445 = vmin.xlane.f32.xlu0 %v444
        %v446 = vpop.xlane.xlu0 %445
        %v447 = vsel %vm313, %v433, inf
        %448 = vmin.xlane.f32.xlu0 %v447
        %v449 = vpop.xlane.xlu0 %448
        %v450 = vsel %vm313, %v434, inf
        %451 = vmin.xlane.f32.xlu0 %v450
        %v452 = vpop.xlane.xlu0 %451
        %v453 = vsel %vm313, %v435, inf
        %454 = vmin.xlane.f32.xlu0 %v453
        %v455 = vpop.xlane.xlu0 %454
        %v456 = vsel %vm313, %v436, inf
        %457 = vmin.xlane.f32.xlu0 %v456
        %v458 = vpop.xlane.xlu0 %457
        %v459 = vsel %vm313, %v437, inf
        %460 = vmin.xlane.f32.xlu0 %v459
        %v461 = vpop.xlane.xlu0 %460
        %v462 = vadd.f32 %v440, 1e-05
        %v463 = vadd.f32 %v443, 1e-05
        %v464 = vadd.f32 %v446, 1e-05
        %v465 = vadd.f32 %v449, 1e-05
        %v466 = vadd.f32 %v452, 1e-05
        %v467 = vadd.f32 %v455, 1e-05
        %v468 = vadd.f32 %v458, 1e-05
        %v469 = vadd.f32 %v461, 1e-05
        %v470 = vrcp.pop %v462
        %v471 = vrcp.pop %v463
        %v472 = vrcp.pop %v464
        %v473 = vrcp.pop %v465
        %v474 = vrcp.pop %v466
        %v475 = vrcp.pop %v467
        %v476 = vrcp.pop %v468
        %v477 = vrcp.pop %v469
        %v478 = vmul.f32 %v470, -2.0
        %v479 = vmul.f32 %v471, -2.0
        %v480 = vmul.f32 %v472, -2.0
        %v481 = vmul.f32 %v473, -2.0
        %v482 = vmul.f32 %v474, -2.0
        %v483 = vmul.f32 %v475, -2.0
        %v484 = vmul.f32 %v476, -2.0
        %v485 = vmul.f32 %v477, -2.0
        %v486 = vmul.f32 %v430, %v478
        %v487 = vmul.f32 %v431, %v479
        %v488 = vmul.f32 %v432, %v480
        %v489 = vmul.f32 %v433, %v481
        %v490 = vmul.f32 %v434, %v482
        %v491 = vmul.f32 %v435, %v483
        %v492 = vmul.f32 %v436, %v484
        %v493 = vmul.f32 %v437, %v485
        %v494 = vmul.f32 %v486, 1.442695
        %v495 = vpow.pop %v494
        %v496 = vmul.f32 %v487, 1.442695
        %v497 = vpow.pop %v496
        %v498 = vmul.f32 %v488, 1.442695
        %v499 = vpow.pop %v498
        %v500 = vmul.f32 %v489, 1.442695
        %v501 = vpow.pop %v500
        %v502 = vmul.f32 %v490, 1.442695
        %v503 = vpow.pop %v502
        %v504 = vmul.f32 %v491, 1.442695
        %v505 = vpow.pop %v504
        %v506 = vmul.f32 %v492, 1.442695
        %v507 = vpow.pop %v506
        %v508 = vmul.f32 %v493, 1.442695
        %v509 = vpow.pop %v508
        %v510 = vsel %vm313, %v495, 0.0
        %511 = vadd.xlane.f32.xlu0 %v510
        %v512 = vpop.xlane.xlu0 %511
        %v513 = vsel %vm313, %v497, 0.0
        %514 = vadd.xlane.f32.xlu0 %v513
        %v515 = vpop.xlane.xlu0 %514
        %v516 = vsel %vm313, %v499, 0.0
        %517 = vadd.xlane.f32.xlu0 %v516
        %v518 = vpop.xlane.xlu0 %517
        %v519 = vsel %vm313, %v501, 0.0
        %520 = vadd.xlane.f32.xlu0 %v519
        %v521 = vpop.xlane.xlu0 %520
        %v522 = vsel %vm313, %v503, 0.0
        %523 = vadd.xlane.f32.xlu0 %v522
        %v524 = vpop.xlane.xlu0 %523
        %v525 = vsel %vm313, %v505, 0.0
        %526 = vadd.xlane.f32.xlu0 %v525
        %v527 = vpop.xlane.xlu0 %526
        %v528 = vsel %vm313, %v507, 0.0
        %529 = vadd.xlane.f32.xlu0 %v528
        %v530 = vpop.xlane.xlu0 %529
        %v531 = vsel %vm313, %v509, 0.0
        %532 = vadd.xlane.f32.xlu0 %v531
        %v533 = vpop.xlane.xlu0 %532
        %v534 = vrcp.pop %v512
        %v535 = vrcp.pop %v515
        %v536 = vrcp.pop %v518
        %v537 = vrcp.pop %v521
        %v538 = vrcp.pop %v524
        %v539 = vrcp.pop %v527
        %v540 = vrcp.pop %v530
        %v541 = vrcp.pop %v533
        %v542 = vmul.f32 %v495, %v534
        %v543 = vmul.f32 %v497, %v535
        %v544 = vmul.f32 %v499, %v536
        %v545 = vmul.f32 %v501, %v537
        %v546 = vmul.f32 %v503, %v538
        %v547 = vmul.f32 %v505, %v539
        %v548 = vmul.f32 %v507, %v540
        %v549 = vmul.f32 %v509, %v541
        %v550 = vld [vmem:[#allocation3] sm:$0x1]
        %v551 = vsel %vm313, %v542, -inf
        %v552 = vsel %vm313, %v543, -inf
        %v553 = vsel %vm313, %v544, -inf
        %v554 = vsel %vm313, %v545, -inf
        %v555 = vsel %vm313, %v546, -inf
        %v556 = vmax.f32 %v551, %v555
        %v557 = vsel %vm313, %v547, -inf
        %v558 = vmax.f32 %v552, %v557
        %v559 = vsel %vm313, %v548, -inf
        %v560 = vmax.f32 %v553, %v559
        %v561 = vsel %vm313, %v549, -inf
        %v562 = vmax.f32 %v554, %v561
        %v563 = vmax.f32 %v556, %v558
        %v564 = vmax.f32 %v560, %v562
        %v565 = vmax.f32 %v563, %v564
        %v566 = vrot.slane %v565, 4
        %v567 = vmax.f32 %v565, %v566
        %v568 = vrot.slane %v567, 2
        %v569 = vmax.f32 %v567, %v568
        %v570 = vrot.slane %v569, 1
        %v571 = vmax.f32 %v569, %v570
        %v572 = vmax.f32 %v550, %v571
        %vm573 = vcmask 516096
        %574 = vst.msk [vmem:[#allocation3] sm:$0x1] %vm573, %v572
        // Predicated region
        $region49: #{cx_loss.1} parent=31 // pred_check
          %p575 = pneg %p256
        $region50: #{cx_loss.1} parent=31 // pred_check_branch
          %577 = sbr.rel (%p575) target = $region52
        $region51: #{cx_loss.1} parent=31 // pred_region
          %v578 = vld [vmem:[#allocation3] sm:$0x1]
          %579 = vst.msk [vmem:[%s254] sm:$0x1] %vm573, %v578
        $region52: #{cx_loss.1} parent=31 // pred_fallthru
          _
        %s580 = sand.u32 %s116, 1
        %s581 = scalar_lea.sflag [#allocation6], %s580
        %s582 = sand.u32 %s116, 1
        %s583 = scalar_lea.vmem [#allocation10], %s582
        // Predicated region
        $region53: #{cx_loss.1} parent=31 // pred_check
          %p584 = pneg %p126
        $region54: #{cx_loss.1} parent=31 // pred_check_branch
          %586 = sbr.rel (%p584) target = $region56
        $region55: #{cx_loss.1} parent=31 // pred_region
          %s588 = ssub.s32 16, 16
          %589 = vsyncadd %s581, %s588
          %s590 = smul.addr %s25, 16
          %s591 = scalar_lea.hbm %s3, %s590
          %s593 = sshll.u32 %s583, 4
          %s594 = int_to_ptr.vmem [resolvable:$true] %s593
          %596 = dma.vmem_to_hbm [thread:$0]  %s594, 16, %s591, %s581
        $region56: #{cx_loss.1} parent=31 // pred_fallthru
          _
      $region32: #{cx_loss.1} parent=5 // pred_fallthru
        _
      %p597 = scmp.le.s32.totalorder 2, %s16
      // Predicated region
      $region57: #{cx_loss.1} parent=5 // pred_check
        %p598 = pneg %p597
      $region58: #{cx_loss.1} parent=5 // pred_check_branch
        %600 = sbr.rel (%p598) target = $region60
      $region59: #{cx_loss.1} parent=5 // pred_region
        %s601 = ssub.s32 %s16, 2
        // Predicated region
        $region61: #{cx_loss.1} parent=59 // pred_check
          %p602 = pneg %p132
        $region62: #{cx_loss.1} parent=59 // pred_check_branch
          %604 = sbr.rel (%p602) target = $region64
        $region63: #{cx_loss.1} parent=59 // pred_region
          %s605 = sand.u32 %s117, 1
          %s606 = scalar_lea.sflag [#allocation6], %s605
          %s607 = sand.u32 %s117, 1
          %s608 = scalar_lea.vmem [#allocation10], %s607
          %609 = dma.done %s606, 16
        $region64: #{cx_loss.1} parent=59 // pred_fallthru
          _
      $region60: #{cx_loss.1} parent=5 // pred_fallthru
        _
    $region6: #{cx_loss.1} parent=1 // loop_footer
      %s20 = sadd.s32 1, %s16
    $region7: #{cx_loss.1} parent=1 // loop_footer_branch
      %15 = sbr.rel target = $region3
    $region8: #{cx_loss.1} parent=1 // loop_exit
      _
    %610 = vsyncpa [#allocation5], 1
    %s611 = scalar_lea.sflag [#allocation5], 1
    %612 = vsyncpa %s611, 1
    %613 = vsyncpa [#allocation8], 1
    %s614 = scalar_lea.sflag [#allocation8], 1
    %615 = vsyncpa %s614, 1
    %616 = vsyncpa [#allocation6], 1
    %s617 = scalar_lea.sflag [#allocation6], 1
    %618 = vsyncpa %s617, 1

</llo_original>
